<compile_context>
chip_gen: v6e
topology: v6e:2x2x1
jax: 0.10.0
libtpu: 0.0.40
codegen_flags: <defaults>
</compile_context>

<pallas_src>
import functools
import math

import jax
import jax.numpy as jnp
from jax.experimental import pallas as pl
from jax.experimental.pallas import tpu as pltpu

FEATURE_CHANNELS = 128
NUM_TRANSFORMER_LAYERS = 6
FFN_DIM_EXPANSION = 4
UPSAMPLE_FACTOR = 8
NUM_DEPTH_CANDIDATES = 64
PADDING_FACTOR = 16


# ----------------------------------------------------------------------------
# Tiling helpers
# ----------------------------------------------------------------------------
def _pick_tile(n, max_tile, multiple=16):
    """Largest divisor of n that is a multiple of `multiple` and <= max_tile.
    Returns None when no such divisor exists."""
    best = None
    upper = min(n, max_tile)
    for t in range(multiple, upper + 1, multiple):
        if n % t == 0:
            best = t
    return best


def _round_up(n, m):
    return ((n + m - 1) // m) * m


def _row_tiling(m, cap):
    """(tile, padded_rows) for a row-tiled kernel: pad-and-slice rather than
    falling back to one huge whole-array VMEM block."""
    cap = max(cap, 8)
    if m <= cap:
        mp = _round_up(m, 8)
        return mp, mp
    t = _pick_tile(m, cap)
    if t is not None and t >= min(cap, 128):
        return t, m
    mp = _round_up(m, cap)
    return cap, mp


def _pad_rows(x, mp):
    m = x.shape[0]
    if mp == m:
        return x
    return jnp.pad(x, ((0, mp - m),) + ((0, 0),) * (x.ndim - 1))


def _layernorm_f32(x, gamma, beta, eps=1e-5):
    mu = jnp.mean(x, axis=-1, keepdims=True)
    xc = x - mu
    var = jnp.mean(xc * xc, axis=-1, keepdims=True)
    inv = jax.lax.rsqrt(var + eps)
    return xc * inv * gamma + beta


# ----------------------------------------------------------------------------
# Pallas kernels
# ----------------------------------------------------------------------------
def _patch_embed_kernel(x_ref, w1_ref, b1_ref, w2_ref, b2_ref, o_ref):
    h = jnp.dot(x_ref[...], w1_ref[...], preferred_element_type=jnp.float32)
    h = jnp.maximum(h + b1_ref[...], 0.0)
    y = jnp.dot(h.astype(jnp.bfloat16), w2_ref[...],
                preferred_element_type=jnp.float32) + b2_ref[...]
    o_ref[...] = y.astype(o_ref.dtype)


def pallas_patch_embed(x, w1, b1, w2, b2):
    m, k = x.shape
    co = w2.shape[1]
    tm, mp = _row_tiling(m, 1024)
    xp = _pad_rows(x, mp)
    row_in = pl.BlockSpec((tm, k), lambda i: (i, 0))
    row_out = pl.BlockSpec((tm, co), lambda i: (i, 0))
    full = lambda shp: pl.BlockSpec(shp, lambda i: (0, 0))
    out = pl.pallas_call(
        _patch_embed_kernel,
        out_shape=jax.ShapeDtypeStruct((mp, co), jnp.bfloat16),
        grid=(mp // tm,),
        in_specs=[row_in, full(w1.shape), full(b1.shape),
                  full(w2.shape), full(b2.shape)],
        out_specs=row_out,
        compiler_params=pltpu.CompilerParams(dimension_semantics=("parallel",)),
    )(xp, w1, b1, w2, b2)
    return out[:m]


def _qkv_self_kernel(x_ref, w_ref, q_ref, k_ref, v_ref):
    c = q_ref.shape[-1]
    qkv = jnp.dot(x_ref[...], w_ref[...], preferred_element_type=jnp.float32)
    q_ref[...] = qkv[:, :c].astype(q_ref.dtype)
    k_ref[...] = qkv[:, c:2 * c].astype(k_ref.dtype)
    v_ref[...] = qkv[:, 2 * c:].astype(v_ref.dtype)


def pallas_qkv_self(x2, wqkv):
    """Self-attention projections: one fused [C, 3C] matmul, one input stream."""
    m, c = x2.shape
    tm, mp = _row_tiling(m, 1024)
    xp = _pad_rows(x2, mp)
    row = pl.BlockSpec((tm, c), lambda i: (i, 0))
    full = lambda shp: pl.BlockSpec(shp, lambda i: (0, 0))
    out_sd = jax.ShapeDtypeStruct((mp, c), jnp.bfloat16)
    q, k, v = pl.pallas_call(
        _qkv_self_kernel,
        out_shape=(out_sd, out_sd, out_sd),
        grid=(mp // tm,),
        in_specs=[row, full(wqkv.shape)],
        out_specs=(row, row, row),
        compiler_params=pltpu.CompilerParams(dimension_semantics=("parallel",)),
    )(xp, wqkv)
    return q[:m], k[:m], v[:m]


def _qkv_cross_kernel(s_ref, t_ref, wq_ref, wkv_ref, q_ref, k_ref, v_ref):
    c = wq_ref.shape[0]
    q = jnp.dot(s_ref[...], wq_ref[...], preferred_element_type=jnp.float32)
    kv = jnp.dot(t_ref[...], wkv_ref[...], preferred_element_type=jnp.float32)
    q_ref[...] = q.astype(q_ref.dtype)
    k_ref[...] = kv[:, :c].astype(k_ref.dtype)
    v_ref[...] = kv[:, c:].astype(v_ref.dtype)


def pallas_qkv_cross(s2, t2, wq, wkv):
    m, c = s2.shape
    tm, mp = _row_tiling(m, 1024)
    sp = _pad_rows(s2, mp)
    tp = _pad_rows(t2, mp)
    row = pl.BlockSpec((tm, c), lambda i: (i, 0))
    full = lambda shp: pl.BlockSpec(shp, lambda i: (0, 0))
    out_sd = jax.ShapeDtypeStruct((mp, c), jnp.bfloat16)
    q, k, v = pl.pallas_call(
        _qkv_cross_kernel,
        out_shape=(out_sd, out_sd, out_sd),
        grid=(mp // tm,),
        in_specs=[row, row, full(wq.shape), full(wkv.shape)],
        out_specs=(row, row, row),
        compiler_params=pltpu.CompilerParams(dimension_semantics=("parallel",)),
    )(sp, tp, wq, wkv)
    return q[:m], k[:m], v[:m]


def _flash_attn_kernel(q_ref, k_ref, v_ref, o_ref, m_sc, l_sc, acc_sc):
    # 1/sqrt(C) attention scale is folded into wq at init; no score multiply here.
    ki = pl.program_id(2)

    @pl.when(ki == 0)
    def _():
        m_sc[...] = jnp.full_like(m_sc, -jnp.inf)
        l_sc[...] = jnp.zeros_like(l_sc)
        acc_sc[...] = jnp.zeros_like(acc_sc)

    q = q_ref[0]
    k = k_ref[0]
    v = v_ref[0]
    s = jax.lax.dot_general(q, k, (((1,), (1,)), ((), ())),
                            preferred_element_type=jnp.float32)
    m_prev = m_sc[...]
    m_new = jnp.maximum(m_prev, jnp.max(s, axis=-1, keepdims=True))
    alpha = jnp.exp(m_prev - m_new)
    p = jnp.exp(s - m_new)
    l_sc[...] = alpha * l_sc[...] + jnp.sum(p, axis=-1, keepdims=True)
    acc_sc[...] = alpha * acc_sc[...] + jnp.dot(
        p.astype(v.dtype), v, preferred_element_type=jnp.float32)
    m_sc[...] = m_new

    @pl.when(ki == pl.num_programs(2) - 1)
    def _():
        o_ref[0] = (acc_sc[...] * pl.reciprocal(l_sc[...], approx=True)
                    ).astype(o_ref.dtype)


def pallas_flash_attention(q, k, v):
    g, n, c = q.shape
    tq = _pick_tile(n, 512) or n
    # When K/V for one attention group fit VMEM, keep them as a single block so
    # the reduction grid collapses to one step (no rescale traffic).
    tk = n if n <= 2048 else (_pick_tile(n, 512) or n)
    # Token-tile (largest parallel) axis first so v7x's two TCs both get work.
    q_spec = pl.BlockSpec((1, tq, c), lambda qi, gi, ki: (gi, qi, 0))
    kv_spec = pl.BlockSpec((1, tk, c), lambda qi, gi, ki: (gi, ki, 0))
    return pl.pallas_call(
        _flash_attn_kernel,
        out_shape=jax.ShapeDtypeStruct((g, n, c), jnp.bfloat16),
        grid=(n // tq, g, n // tk),
        in_specs=[q_spec, kv_spec, kv_spec],
        out_specs=q_spec,
        scratch_shapes=[pltpu.VMEM((tq, 1), jnp.float32),
                        pltpu.VMEM((tq, 1), jnp.float32),
                        pltpu.VMEM((tq, c), jnp.float32)],
        compiler_params=pltpu.CompilerParams(
            dimension_semantics=("parallel", "parallel", "arbitrary"),
            vmem_limit_bytes=32 * 1024 * 1024),
    )(q, k, v)


def _self_epi_kernel(attn_ref, src_ref, wm_ref, g1_ref, b1_ref, o_ref):
    msg = jnp.dot(attn_ref[...], wm_ref[...], preferred_element_type=jnp.float32)
    msg = _layernorm_f32(msg, g1_ref[...], b1_ref[...])
    o_ref[...] = (src_ref[...].astype(jnp.float32) + msg).astype(o_ref.dtype)


def pallas_self_epilogue(attn2, src2, p):
    m, c = attn2.shape
    tm, mp = _row_tiling(m, 1024)
    ap = _pad_rows(attn2, mp)
    sp = _pad_rows(src2, mp)
    row = pl.BlockSpec((tm, c), lambda i: (i, 0))
    full = lambda shp: pl.BlockSpec(shp, lambda i: (0, 0))
    out = pl.pallas_call(
        _self_epi_kernel,
        out_shape=jax.ShapeDtypeStruct((mp, c), jnp.bfloat16),
        grid=(mp // tm,),
        in_specs=[row, row, full(p["wm"].shape),
                  full(p["ln1_g"].shape), full(p["ln1_b"].shape)],
        out_specs=row,
        compiler_params=pltpu.CompilerParams(dimension_semantics=("parallel",)),
    )(ap, sp, p["wm"], p["ln1_g"], p["ln1_b"])
    return out[:m]


def _cross_epi_kernel(attn_ref, src_ref, wm_ref, g1_ref, bb1_ref,
                      w1_ref, fb1_ref, w2_ref, fb2_ref,
                      g2_ref, bb2_ref, o_ref):
    src_bf = src_ref[...]
    src_f32 = src_bf.astype(jnp.float32)
    # merge projection + LN1
    msg = jnp.dot(attn_ref[...], wm_ref[...], preferred_element_type=jnp.float32)
    msg = _layernorm_f32(msg, g1_ref[...], bb1_ref[...])
    # FFN on channel-concat [tm, 2C] with a single stacked [2C, 8C] weight
    # (K=256 fills the 256-deep MXU on v6e/v7x).
    x_cat = jnp.concatenate([src_bf, msg.astype(jnp.bfloat16)], axis=-1)
    h = jnp.dot(x_cat, w1_ref[...], preferred_element_type=jnp.float32)
    # TODO(synk): PyTorch uses exact (erf) GELU; tanh approximation kept for safe Mosaic lowering.
    h = jax.nn.gelu(h + fb1_ref[...], approximate=True)
    out = jnp.dot(h.astype(jnp.bfloat16), w2_ref[...],
                  preferred_element_type=jnp.float32) + fb2_ref[...]
    out = _layernorm_f32(out, g2_ref[...], bb2_ref[...])
    o_ref[...] = (src_f32 + out).astype(o_ref.dtype)


def pallas_cross_epilogue(attn2, src2, p):
    m, c = attn2.shape
    tm, mp = _row_tiling(m, 512)   # [tm,1024] f32 hidden stays well inside VMEM
    ap = _pad_rows(attn2, mp)
    sp = _pad_rows(src2, mp)
    row = pl.BlockSpec((tm, c), lambda i: (i, 0))
    full = lambda shp: pl.BlockSpec(shp, lambda i: (0, 0))
    out = pl.pallas_call(
        _cross_epi_kernel,
        out_shape=jax.ShapeDtypeStruct((mp, c), jnp.bfloat16),
        grid=(mp // tm,),
        in_specs=[row, row,
                  full(p["wm"].shape), full(p["ln1_g"].shape), full(p["ln1_b"].shape),
                  full(p["w1"].shape), full(p["b1"].shape),
                  full(p["w2"].shape), full(p["b2"].shape),
                  full(p["ln2_g"].shape), full(p["ln2_b"].shape)],
        out_specs=row,
        compiler_params=pltpu.CompilerParams(
            dimension_semantics=("parallel",),
            vmem_limit_bytes=32 * 1024 * 1024),
    )(ap, sp, p["wm"], p["ln1_g"], p["ln1_b"],
      p["w1"], p["b1"], p["w2"], p["b2"], p["ln2_g"], p["ln2_b"])
    return out[:m]


def _depth_regression_kernel(feat0_ref, warped_ref, o_ref, *,
                             inv_sqrt_c, min_inv, step_inv, d_chunk):
    feat0 = feat0_ref[0].astype(jnp.float32)          # [TN, C]
    d = warped_ref.shape[1]
    # Chunk the candidate axis: never materialize a full-D f32 copy of the
    # bf16 [D, TN, C] block; products and reductions accumulate in f32.
    parts = []
    for d0 in range(0, d, d_chunk):
        wc = warped_ref[0, pl.ds(d0, d_chunk)].astype(jnp.float32)   # [dc, TN, C]
        parts.append(jnp.sum(feat0[None, :, :] * wc, axis=-1))       # [dc, TN]
    corr = jnp.concatenate(parts, axis=0) * inv_sqrt_c               # [D, TN]
    m = jnp.max(corr, axis=0, keepdims=True)
    e = jnp.exp(corr - m)
    prob = e * pl.reciprocal(jnp.sum(e, axis=0, keepdims=True), approx=True)
    # inverse-depth candidates generated in-register (iota, no VMEM block)
    cand = min_inv + step_inv * jax.lax.broadcasted_iota(jnp.float32, corr.shape, 0)
    inv_depth = jnp.sum(prob * cand, axis=0)                          # [TN]
    o_ref[...] = inv_depth[None, None, :].astype(o_ref.dtype)


def pallas_depth_regression(feat0, warped, min_inv, max_inv):
    b, n, c = feat0.shape
    d = warped.shape[1]
    tn = _pick_tile(n, 512, multiple=128) or n   # lane-dense output tiles
    step = (max_inv - min_inv) / (d - 1)
    kernel = functools.partial(
        _depth_regression_kernel, inv_sqrt_c=1.0 / math.sqrt(c),
        min_inv=float(min_inv), step_inv=float(step),
        d_chunk=min(8, d))
    return pl.pallas_call(
        kernel,
        out_shape=jax.ShapeDtypeStruct((b, 1, n), jnp.float32),
        # token-tile (largest parallel) axis first for v7x dual-TC sharding
        grid=(n // tn, b),
        in_specs=[pl.BlockSpec((1, tn, c), lambda j, i: (i, j, 0)),
                  pl.BlockSpec((1, d, tn, c), lambda j, i: (i, 0, j, 0))],
        out_specs=pl.BlockSpec((1, 1, tn), lambda j, i: (i, 0, j)),
        compiler_params=pltpu.CompilerParams(
            dimension_semantics=("parallel", "parallel"),
            vmem_limit_bytes=32 * 1024 * 1024),
    )(feat0, warped)


# ----------------------------------------------------------------------------
# Parameter init (deterministic, synthetic; matmul weights bf16, norms/bias f32)
# ----------------------------------------------------------------------------
def init_params(key):
    c = FEATURE_CHANNELS
    hidden = 2 * c * FFN_DIM_EXPANSION
    inv_sqrt_c = 1.0 / math.sqrt(c)
    keys = iter(jax.random.split(key, 256))

    def nrm_f32(shape, scale=0.05):
        return scale * jax.random.normal(next(keys), shape, jnp.float32)

    def nrm(shape, scale=0.05):
        return nrm_f32(shape, scale).astype(jnp.bfloat16)

    zeros = lambda s: jnp.zeros(s, jnp.float32)
    ones = lambda s: jnp.ones(s, jnp.float32)

    p = {
        "patch_w1": nrm((3 * 64, c)), "patch_b1": zeros((1, c)),
        "patch_w2": nrm((c, c)), "patch_b2": zeros((1, c)),
        "layers": [],
    }
    for _ in range(NUM_TRANSFORMER_LAYERS):
        layer = {}
        for name in ("self", "cross"):
            # attention scale 1/sqrt(C) folded into wq
            wq = (nrm_f32((c, c)) * inv_sqrt_c).astype(jnp.bfloat16)
            wkv = nrm((c, 2 * c))
            sub = {
                "wm": nrm((c, c)),
                "ln1_g": ones((1, c)), "ln1_b": zeros((1, c)),
            }
            if name == "self":
                sub["wqkv"] = jnp.concatenate([wq, wkv], axis=1)      # [C, 3C]
            else:
                sub["wq"] = wq
                sub["wkv"] = wkv
                sub.update({
                    # stacked FFN-in weight: [2C, 8C]
                    "w1": jnp.concatenate([nrm((c, hidden)), nrm((c, hidden))], axis=0),
                    "b1": zeros((1, hidden)),
                    "w2": nrm((hidden, c)), "b2": zeros((1, c)),
                    "ln2_g": ones((1, c)), "ln2_b": zeros((1, c)),
                })
            layer[name] = sub
        p["layers"].append(layer)
    return p


# ----------------------------------------------------------------------------
# JAX glue: backbone patchify, position embedding, plane-sweep warping
# ----------------------------------------------------------------------------
def extract_features(params, images_nchw):
    # TODO(synk): full ResNet CNNEncoder replaced by an 8x8 stride-8 patch projection.
    b, cin, h, w = images_nchw.shape
    hf, wf = h // UPSAMPLE_FACTOR, w // UPSAMPLE_FACTOR
    patches = images_nchw.reshape(b, cin, hf, 8, wf, 8)
    patches = jnp.transpose(patches, (0, 2, 4, 1, 3, 5)).reshape(b * hf * wf, cin * 64)
    feat = pallas_patch_embed(patches.astype(jnp.bfloat16),
                              params["patch_w1"], params["patch_b1"],
                              params["patch_w2"], params["patch_b2"])
    return feat.reshape(b, hf * wf, FEATURE_CHANNELS), (hf, wf)


def position_embedding_sine(hf, wf, c):
    num_pos_feats = c // 2
    temperature = 10000.0
    y_embed = jnp.arange(1, hf + 1, dtype=jnp.float32)[:, None] * jnp.ones((1, wf), jnp.float32)
    x_embed = jnp.arange(1, wf + 1, dtype=jnp.float32)[None, :] * jnp.ones((hf, 1), jnp.float32)
    dim_t = temperature ** (2.0 * (jnp.arange(num_pos_feats, dtype=jnp.float32) // 2) / num_pos_feats)
    pos_x = x_embed[:, :, None] / dim_t
    pos_y = y_embed[:, :, None] / dim_t
    pos_x = jnp.concatenate([jnp.sin(pos_x[:, :, 0::2]), jnp.cos(pos_x[:, :, 1::2])], axis=-1)
    pos_y = jnp.concatenate([jnp.sin(pos_y[:, :, 0::2]), jnp.cos(pos_y[:, :, 1::2])], axis=-1)
    return jnp.concatenate([pos_y, pos_x], axis=-1)  # [hf, wf, c]


def bilinear_sample(feat_hwc, u, v):
    hf, wf, _ = feat_hwc.shape
    x0 = jnp.floor(u)
    y0 = jnp.floor(v)
    x1, y1 = x0 + 1.0, y0 + 1.0
    wx1, wy1 = u - x0, v - y0
    wx0, wy0 = 1.0 - wx1, 1.0 - wy1

    def gather(y, x):
        valid = (x >= 0) & (x <= wf - 1) & (y >= 0) & (y <= hf - 1)
        xi = jnp.clip(x, 0, wf - 1).astype(jnp.int32)
        yi = jnp.clip(y, 0, hf - 1).astype(jnp.int32)
        return feat_hwc[yi, xi].astype(jnp.float32) * valid[..., None].astype(jnp.float32)

    out = (gather(y0, x0) * (wy0 * wx0)[..., None] + gather(y0, x1) * (wy0 * wx1)[..., None]
           + gather(y1, x0) * (wy1 * wx0)[..., None] + gather(y1, x1) * (wy1 * wx1)[..., None])
    return out  # [..., C] f32


def warp_with_pose_depth_candidates(feat1_hwc, intrinsics, pose, depths):
    # plane-sweep warp of the source feature map for each candidate depth (JAX glue: gather)
    hf, wf, _ = feat1_hwc.shape
    ys, xs = jnp.meshgrid(jnp.arange(hf, dtype=jnp.float32),
                          jnp.arange(wf, dtype=jnp.float32), indexing="ij")
    pix = jnp.stack([xs, ys, jnp.ones_like(xs)], axis=0).reshape(3, -1)       # [3, N]
    rays = jnp.linalg.inv(intrinsics) @ pix                                   # [3, N]
    pts = rays[None, :, :] * depths[:, None, None]                            # [D, 3, N]
    rot, trans = pose[:3, :3], pose[:3, 3]
    pts_src = jnp.einsum("ij,djn->din", rot, pts) + trans[None, :, None]
    proj = jnp.einsum("ij,djn->din", intrinsics, pts_src)
    z = jnp.maximum(proj[:, 2], 1e-3)
    u = proj[:, 0] / z
    v = proj[:, 1] / z
    # keep the cost volume bf16 end-to-end (interpolation in f32, output bf16)
    return bilinear_sample(feat1_hwc, u, v).astype(jnp.bfloat16)              # [D, N, C]


# ----------------------------------------------------------------------------
# Transformer (UniMatch FeatureTransformer, swin splits approximated)
# ----------------------------------------------------------------------------
def transformer_layer(p, source, target, with_ffn, is_self):
    g, n, c = source.shape
    m = g * n
    s2 = source.reshape(m, c)
    if is_self:
        q, k, v = pallas_qkv_self(s2, p["wqkv"])
    else:
        t2 = target.reshape(m, c)
        q, k, v = pallas_qkv_cross(s2, t2, p["wq"], p["wkv"])
    attn = pallas_flash_attention(q.reshape(g, n, c),
                                  k.reshape(g, n, c),
                                  v.reshape(g, n, c))
    attn2 = attn.reshape(m, c)
    if with_ffn:
        out2 = pallas_cross_epilogue(attn2, s2, p)
    else:
        out2 = pallas_self_epilogue(attn2, s2, p)
    return out2.reshape(g, n, c)


def transformer_block(layer_p, source, target):
    source = transformer_layer(layer_p["self"], source, source, with_ffn=False, is_self=True)
    source = transformer_layer(layer_p["cross"], source, target, with_ffn=True, is_self=False)
    return source


def feature_transformer(layers_p, feature0, feature1):
    # TODO(synk): swin window attention (attn_splits_list=[2]) not implemented; full attention used.
    b = feature0.shape[0]
    concat0 = jnp.concatenate([feature0, feature1], axis=0)
    concat1 = jnp.concatenate([feature1, feature0], axis=0)
    for lp in layers_p:
        concat0 = transformer_block(lp, concat0, concat1)
        concat1 = jnp.concatenate([concat0[b:], concat0[:b]], axis=0)
    return concat0[:b], concat0[b:]


# ----------------------------------------------------------------------------
# Full forward (mirrors GMDepth_Wrapped.forward)
# ----------------------------------------------------------------------------
def gmdepth_forward(params, images, keyview_idx, poses, intrinsics, depth_range):
    kv = int(keyview_idx)
    src = [i for i in range(len(images)) if i != kv][0]
    image_key = images[kv]
    image_source = images[src]
    intrinsics_key = intrinsics[kv]
    pose_source = poses[src]

    b, _, h, w = image_key.shape
    pad_ht = (-h) % PADDING_FACTOR
    pad_wd = (-w) % PADDING_FACTOR

    def pad(img):  # kitti mode: pad top and right, replicate
        return jnp.pad(img, ((0, 0), (0, 0), (pad_ht, 0), (0, pad_wd)), mode="edge")

    image_key, image_source = pad(image_key), pad(image_source)
    hp, wp = h + pad_ht, w + pad_wd

    # CNN backbone on both views (concatenated along batch, like UniMatch)
    concat = jnp.concatenate([image_key, image_source], axis=0)
    feats, (hf, wf) = extract_features(params, concat)

    # feature_add_position (sine position embedding); keep features bf16
    pos = position_embedding_sine(hf, wf, FEATURE_CHANNELS).reshape(1, hf * wf, FEATURE_CHANNELS)
    feature0 = (feats[:b].astype(jnp.float32) + pos).astype(jnp.bfloat16)
    feature1 = (feats[b:].astype(jnp.float32) + pos).astype(jnp.bfloat16)

    # 6-layer transformer
    feature0, feature1 = feature_transformer(params["layers"], feature0, feature1)

    # depth candidates in inverse-depth space (static python floats)
    min_depth = 1.0 / depth_range[1]
    max_depth = 1.0 / depth_range[0]
    inv_cand = jnp.linspace(min_depth, max_depth, NUM_DEPTH_CANDIDATES, dtype=jnp.float32)

    # plane-sweep warp of the source features (intrinsics scaled to 1/8 res)
    scale = jnp.array([[1.0 / UPSAMPLE_FACTOR], [1.0 / UPSAMPLE_FACTOR], [1.0]], jnp.float32)
    k_feat = intrinsics_key * scale[None]
    feat1_maps = feature1.reshape(b, hf, wf, FEATURE_CHANNELS)
    warped = jax.vmap(
        lambda f, km, tm: warp_with_pose_depth_candidates(f, km, tm, 1.0 / inv_cand)
    )(feat1_maps, k_feat, pose_source)                                # [B, D, N, C] bf16

    # correlation softmax regression (Pallas hot path, token-tiled, bf16 in)
    inv_depth = pallas_depth_regression(feature0, warped,
                                        float(min_depth), float(max_depth))  # [B, 1, N]
    inv_depth = inv_depth.reshape(b, hf, wf)
    depth_low = 1.0 / jnp.clip(inv_depth, min_depth, max_depth)

    # TODO(synk): reg_refine (GRU refinement, num_reg_refine=1) not implemented.
    # x8 bilinear upsample (align_corners semantics approximated by jax.image.resize)
    depth_up = jax.image.resize(depth_low, (b, hp, wp), method="bilinear")

    # unpad (kitti mode: crop top and right), then unsqueeze channel dim
    depth = depth_up[:, pad_ht:, :w]
    pred = {"depth": depth[:, None, :, :]}
    aux = {}
    return pred, aux


# ----------------------------------------------------------------------------
if __name__ == "__main__":
    B, H, W = 2, 32, 32
    key = jax.random.PRNGKey(0)
    k1, k2 = jax.random.split(key)
    # forward() receives already-normalized image tensors (input_adapter does the
    # ImageNet normalization); synthesize them directly as float noise.
    images = [jax.random.normal(k1, (B, 3, H, W), jnp.float32),
              jax.random.normal(k2, (B, 3, H, W), jnp.float32)]
    keyview_idx = 0

    eye = jnp.broadcast_to(jnp.eye(4, dtype=jnp.float32), (B, 4, 4))
    theta = 0.05
    rot = jnp.array([[math.cos(theta), 0.0, math.sin(theta)],
                     [0.0, 1.0, 0.0],
                     [-math.sin(theta), 0.0, math.cos(theta)]], jnp.float32)
    pose_src = jnp.eye(4, dtype=jnp.float32).at[:3, :3].set(rot).at[:3, 3].set(
        jnp.array([0.2, 0.0, 0.0], jnp.float32))
    poses = [eye, jnp.broadcast_to(pose_src, (B, 4, 4))]

    K = jnp.array([[30.0, 0.0, 16.0], [0.0, 30.0, 16.0], [0.0, 0.0, 1.0]], jnp.float32)
    intrinsics = [jnp.broadcast_to(K, (B, 3, 3)), jnp.broadcast_to(K, (B, 3, 3))]
    depth_range = [0.2, 100.0]

    params = init_params(jax.random.PRNGKey(42))
    pred, aux = gmdepth_forward(params, images, keyview_idx, poses, intrinsics, depth_range)
    depth = jax.block_until_ready(pred["depth"])
    assert depth.shape == (B, 1, H, W), depth.shape
    assert bool(jnp.all(jnp.isfinite(depth)))
    print("KERNEL_OK")
</pallas_src>

<mosaic_0001>
module attributes {stable_mosaic.version = 11 : i64} {
  func.func @_patch_embed_kernel(%arg0: i32, %arg1: memref<64x192xbf16, #tpu.memory_space<vmem>>, %arg2: memref<192x128xbf16, #tpu.memory_space<vmem>>, %arg3: memref<1x128xf32, #tpu.memory_space<vmem>>, %arg4: memref<128x128xbf16, #tpu.memory_space<vmem>>, %arg5: memref<1x128xf32, #tpu.memory_space<vmem>>, %arg6: memref<64x128xbf16, #tpu.memory_space<vmem>>) attributes {dimension_semantics = [#tpu.dimension_semantics<parallel>], iteration_bounds = array<i64: 1>, scalar_prefetch = 0 : i64, scratch_operands = 0 : i64, tpu.core_type = #tpu.core_type<tc>, window_params = [{transform_indices = @transform_0, window_bounds = array<i64: 64, 192>}, {pipeline_mode = #tpu.pipeline_mode<synchronous>, transform_indices = @transform_1, window_bounds = array<i64: 192, 128>}, {pipeline_mode = #tpu.pipeline_mode<synchronous>, transform_indices = @transform_2, window_bounds = array<i64: 1, 128>}, {pipeline_mode = #tpu.pipeline_mode<synchronous>, transform_indices = @transform_3, window_bounds = array<i64: 128, 128>}, {pipeline_mode = #tpu.pipeline_mode<synchronous>, transform_indices = @transform_4, window_bounds = array<i64: 1, 128>}, {transform_indices = @transform_5, window_bounds = array<i64: 64, 128>}]} {
    %c0 = arith.constant 0 : index
    %c0_0 = arith.constant 0 : index
    %0 = vector.load %arg1[%c0, %c0_0] : memref<64x192xbf16, #tpu.memory_space<vmem>>, vector<64x192xbf16>
    %c0_1 = arith.constant 0 : index
    %c0_2 = arith.constant 0 : index
    %1 = vector.load %arg2[%c0_1, %c0_2] : memref<192x128xbf16, #tpu.memory_space<vmem>>, vector<192x128xbf16>
    %cst = arith.constant dense<0.000000e+00> : vector<64x128xf32>
    %2 = tpu.matmul %0, %1, %cst {dimension_numbers = #tpu.dot_dimension_numbers<[1], [0], [0], [1], [0, 0, 1, 1], [], []>} : vector<64x192xbf16>, vector<192x128xbf16>, vector<64x128xf32> -> vector<64x128xf32>
    %c0_3 = arith.constant 0 : index
    %c0_4 = arith.constant 0 : index
    %3 = vector.load %arg3[%c0_3, %c0_4] : memref<1x128xf32, #tpu.memory_space<vmem>>, vector<1x128xf32>
    %4 = vector.broadcast %3 : vector<1x128xf32> to vector<64x128xf32>
    %5 = arith.addf %2, %4 : vector<64x128xf32>
    %cst_5 = arith.constant 0.000000e+00 : f32
    %6 = vector.broadcast %cst_5 : f32 to vector<64x128xf32>
    %7 = arith.maximumf %5, %6 : vector<64x128xf32>
    %8 = arith.truncf %7 : vector<64x128xf32> to vector<64x128xbf16>
    %c0_6 = arith.constant 0 : index
    %c0_7 = arith.constant 0 : index
    %9 = vector.load %arg4[%c0_6, %c0_7] : memref<128x128xbf16, #tpu.memory_space<vmem>>, vector<128x128xbf16>
    %cst_8 = arith.constant dense<0.000000e+00> : vector<64x128xf32>
    %10 = tpu.matmul %8, %9, %cst_8 {dimension_numbers = #tpu.dot_dimension_numbers<[1], [0], [0], [1], [0, 0, 1, 1], [], []>} : vector<64x128xbf16>, vector<128x128xbf16>, vector<64x128xf32> -> vector<64x128xf32>
    %c0_9 = arith.constant 0 : index
    %c0_10 = arith.constant 0 : index
    %11 = vector.load %arg5[%c0_9, %c0_10] : memref<1x128xf32, #tpu.memory_space<vmem>>, vector<1x128xf32>
    %12 = vector.broadcast %11 : vector<1x128xf32> to vector<64x128xf32>
    %13 = arith.addf %10, %12 : vector<64x128xf32>
    %14 = arith.truncf %13 : vector<64x128xf32> to vector<64x128xbf16>
    %c0_11 = arith.constant 0 : index
    %c0_12 = arith.constant 0 : index
    %15 = vector.load %arg6[%c0_11, %c0_12] : memref<64x128xbf16, #tpu.memory_space<vmem>>, vector<64x128xbf16>
    tpu.vector_store %arg6[%c0_11, %c0_12], %14 {strides = array<i32>} : memref<64x128xbf16, #tpu.memory_space<vmem>>, vector<64x128xbf16>,
    return
  }
  func.func @transform_0(%arg0: i32) -> (i32, i32) {
    %c0_i32 = arith.constant 0 : i32
    %c0_i32_0 = arith.constant 0 : i32
    return %arg0, %c0_i32 : i32, i32
  }
  func.func @transform_1(%arg0: i32) -> (i32, i32) {
    %c0_i32 = arith.constant 0 : i32
    %c0_i32_0 = arith.constant 0 : i32
    %c0_i32_1 = arith.constant 0 : i32
    return %c0_i32, %c0_i32_0 : i32, i32
  }
  func.func @transform_2(%arg0: i32) -> (i32, i32) {
    %c0_i32 = arith.constant 0 : i32
    %c0_i32_0 = arith.constant 0 : i32
    %c0_i32_1 = arith.constant 0 : i32
    return %c0_i32, %c0_i32_0 : i32, i32
  }
  func.func @transform_3(%arg0: i32) -> (i32, i32) {
    %c0_i32 = arith.constant 0 : i32
    %c0_i32_0 = arith.constant 0 : i32
    %c0_i32_1 = arith.constant 0 : i32
    return %c0_i32, %c0_i32_0 : i32, i32
  }
  func.func @transform_4(%arg0: i32) -> (i32, i32) {
    %c0_i32 = arith.constant 0 : i32
    %c0_i32_0 = arith.constant 0 : i32
    %c0_i32_1 = arith.constant 0 : i32
    return %c0_i32, %c0_i32_0 : i32, i32
  }
  func.func @transform_5(%arg0: i32) -> (i32, i32) {
    %c0_i32 = arith.constant 0 : i32
    %c0_i32_0 = arith.constant 0 : i32
    return %arg0, %c0_i32 : i32, i32
  }
}

</mosaic_0001>

<llo_original>
// kernel: tpu_custom_call.1
$region0: #{tpu_custom_call.1}
  #allocation0 [shape = 'u32[]', space=smem, size = 0x4, offset = 0x4, fixed_abs, tag = 'smem constant byte address 0x4 - core index']
  #allocation1 [shape = 'u32[144,128]{1,0:T(1,128)}', space=vmem, size = 0x12000, scoped, tag = 'internal scratch']
  %s0 = inlined_call_operand.hbm [shape: bf16[64,192], index: 0, kind: input, shape index: {}]
  %s1 = inlined_call_operand.hbm [shape: bf16[192,128], index: 1, kind: input, shape index: {}]
  %s2 = inlined_call_operand.vmem [shape: f32[1,128], index: 2, kind: input, shape index: {}]
  %s3 = inlined_call_operand.hbm [shape: bf16[128,128], index: 3, kind: input, shape index: {}]
  %s4 = inlined_call_operand.vmem [shape: f32[1,128], index: 4, kind: input, shape index: {}]
  %s5 = inlined_call_operand.hbm [shape: bf16[64,128], index: 5, kind: output, shape index: {}]
  %s6 = sld [smem:[#allocation0]]
  $region42: #{tpu_custom_call.1} parent=0
    _
  %s8 = ssub.s32 1, %s6
  %s9 = scalar_select 0, %s8, %s6
  $region1: #{tpu_custom_call.1} parent=0
    #allocation2 [shape = 'u8[32768]{0}', space=vmem, size = 0x8000, scoped, tag = 'input window, operand 0, single buffered']
    #allocation3 [shape = 's32[1]{0}', space=sflag, size = 0x4, scoped, tag = 'scoped memory for tpu_custom_call.1']
    #allocation4 [shape = 's32[1]{0}', space=sflag, size = 0x4, scoped, tag = 'scoped memory for tpu_custom_call.1']
    #allocation5 [shape = 'u8[49152]{0}', space=vmem, size = 0xc000, scoped, tag = 'input window, operand 1, single buffered']
    #allocation6 [shape = 's32[1]{0}', space=sflag, size = 0x4, scoped, tag = 'scoped memory for tpu_custom_call.1']
    #allocation7 [shape = 'u8[32768]{0}', space=vmem, size = 0x8000, scoped, tag = 'input window, operand 3, single buffered']
    #allocation8 [shape = 'u8[16384]{0}', space=vmem, size = 0x4000, scoped, tag = 'output window, operand 0, single buffered']
    %10 = vsyncpa [#allocation3], 0
    %11 = vsyncpa [#allocation6], 0
    %12 = vsyncpa [#allocation4], 0
    // Predicated region
    $region2: #{tpu_custom_call.1} parent=1 // pred_check
      _
    $region3: #{tpu_custom_call.1} parent=1 // pred_check_branch
      %14 = sbr.rel (0) target = $region5
    $region4: #{tpu_custom_call.1} parent=1 // pred_region
      %s16 = ssub.s32 1024, 1024
      %17 = vsyncadd [#allocation3], %s16
      %s18 = sshll.u32 [#allocation2], 4
      %s19 = int_to_ptr.vmem [resolvable:$true] %s18
      %24 = dma.hbm_to_vmem [thread:$0]  %s0, 1024, %s19, [#allocation3], 128, 128, 8
    $region5: #{tpu_custom_call.1} parent=1 // pred_fallthru
      _
    // Predicated region
    $region6: #{tpu_custom_call.1} parent=1 // pred_check
      _
    $region7: #{tpu_custom_call.1} parent=1 // pred_check_branch
      %26 = sbr.rel (0) target = $region9
    $region8: #{tpu_custom_call.1} parent=1 // pred_region
      %s28 = ssub.s32 1536, 1536
      %29 = vsyncadd [#allocation6], %s28
      %s30 = sshll.u32 [#allocation5], 4
      %s31 = int_to_ptr.vmem [resolvable:$true] %s30
      %36 = dma.hbm_to_vmem [thread:$0]  %s1, 1536, %s31, [#allocation6], 64, 64, 4
    $region9: #{tpu_custom_call.1} parent=1 // pred_fallthru
      _
    // Predicated region
    $region10: #{tpu_custom_call.1} parent=1 // pred_check
      _
    $region11: #{tpu_custom_call.1} parent=1 // pred_check_branch
      %38 = sbr.rel (0) target = $region13
    $region12: #{tpu_custom_call.1} parent=1 // pred_region
      _
    $region13: #{tpu_custom_call.1} parent=1 // pred_fallthru
      _
    // Predicated region
    $region14: #{tpu_custom_call.1} parent=1 // pred_check
      _
    $region15: #{tpu_custom_call.1} parent=1 // pred_check_branch
      %40 = sbr.rel (0) target = $region17
    $region16: #{tpu_custom_call.1} parent=1 // pred_region
      %s42 = ssub.s32 1024, 1024
      %43 = vsyncadd [#allocation6], %s42
      %s44 = sshll.u32 [#allocation7], 4
      %s45 = int_to_ptr.vmem [resolvable:$true] %s44
      %50 = dma.hbm_to_vmem [thread:$0]  %s3, 1024, %s45, [#allocation6], 64, 64, 4
    $region17: #{tpu_custom_call.1} parent=1 // pred_fallthru
      _
    // Predicated region
    $region18: #{tpu_custom_call.1} parent=1 // pred_check
      _
    $region19: #{tpu_custom_call.1} parent=1 // pred_check_branch
      %52 = sbr.rel (0) target = $region21
    $region20: #{tpu_custom_call.1} parent=1 // pred_region
      _
    $region21: #{tpu_custom_call.1} parent=1 // pred_fallthru
      _
    // Predicated region
    $region22: #{tpu_custom_call.1} parent=1 // pred_check
      _
    $region23: #{tpu_custom_call.1} parent=1 // pred_check_branch
      %54 = sbr.rel (0) target = $region25
    $region24: #{tpu_custom_call.1} parent=1 // pred_region
      %55 = dma.done [#allocation3], 1024
    $region25: #{tpu_custom_call.1} parent=1 // pred_fallthru
      _
    // Predicated region
    $region26: #{tpu_custom_call.1} parent=1 // pred_check
      _
    $region27: #{tpu_custom_call.1} parent=1 // pred_check_branch
      %57 = sbr.rel (0) target = $region29
    $region28: #{tpu_custom_call.1} parent=1 // pred_region
      %58 = dma.done [#allocation6], 1536
    $region29: #{tpu_custom_call.1} parent=1 // pred_fallthru
      _
    // Predicated region
    $region30: #{tpu_custom_call.1} parent=1 // pred_check
      _
    $region31: #{tpu_custom_call.1} parent=1 // pred_check_branch
      %60 = sbr.rel (0) target = $region33
    $region32: #{tpu_custom_call.1} parent=1 // pred_region
      %61 = dma.done [#allocation6], 1024
    $region33: #{tpu_custom_call.1} parent=1 // pred_fallthru
      _
    %v63 = vld [vmem:[#allocation2] sm:$0xff]
    %v64 = vld [vmem:[#allocation2 + $0x8] sm:$0xff]
    %v65 = vld [vmem:[#allocation2 + $0x10] sm:$0xff]
    %v66 = vld [vmem:[#allocation2 + $0x18] sm:$0xff]
    %v67 = vld [vmem:[#allocation2 + $0x20] sm:$0xff]
    %v68 = vld [vmem:[#allocation2 + $0x28] sm:$0xff]
    %v69 = vld [vmem:[#allocation2 + $0x30] sm:$0xff]
    %v70 = vld [vmem:[#allocation2 + $0x38] sm:$0xff]
    %v71 = vld [vmem:[#allocation5] sm:$0xf]
    %v72 = vld [vmem:[#allocation5 + $0x4] sm:$0xf]
    %v73 = vld [vmem:[#allocation5 + $0x8] sm:$0xf]
    %v74 = vld [vmem:[#allocation5 + $0xc] sm:$0xf]
    %v75 = vld [vmem:[#allocation5 + $0x10] sm:$0xf]
    %v76 = vld [vmem:[#allocation5 + $0x14] sm:$0xf]
    %v77 = vld [vmem:[#allocation5 + $0x18] sm:$0xf]
    %v78 = vld [vmem:[#allocation5 + $0x1c] sm:$0xf]
    %v79 = vld [vmem:[#allocation5 + $0x20] sm:$0xf]
    %v80 = vld [vmem:[#allocation5 + $0x24] sm:$0xf]
    %v81 = vld [vmem:[#allocation5 + $0x28] sm:$0xf]
    %v82 = vld [vmem:[#allocation5 + $0x2c] sm:$0xf]
    %v83 = vld [vmem:[#allocation5 + $0x30] sm:$0xf]
    %v84 = vld [vmem:[#allocation5 + $0x34] sm:$0xf]
    %v85 = vld [vmem:[#allocation5 + $0x38] sm:$0xf]
    %v86 = vld [vmem:[#allocation5 + $0x3c] sm:$0xf]
    %v87 = vld [vmem:[#allocation5 + $0x40] sm:$0xf]
    %v88 = vld [vmem:[#allocation5 + $0x44] sm:$0xf]
    %v89 = vld [vmem:[#allocation5 + $0x48] sm:$0xf]
    %v90 = vld [vmem:[#allocation5 + $0x4c] sm:$0xf]
    %v91 = vld [vmem:[#allocation5 + $0x50] sm:$0xf]
    %v92 = vld [vmem:[#allocation5 + $0x54] sm:$0xf]
    %v93 = vld [vmem:[#allocation5 + $0x58] sm:$0xf]
    %v94 = vld [vmem:[#allocation5 + $0x5c] sm:$0xf]
    %v95 = vld [vmem:[%s2] sm:$0x1]
    %v97 = vlaneseq
    %v98 = vshrl.u32 %v97, 7
    %v99 = vsub.s32 0, %v98
    %v100 = vrot.slane %v95, %v99
    %v110 = vunpack.c.l.b16 %v63
    %v111 = vunpack.c.h.b16 %v63
    %v112 = vunpack.c.l.b16 %v64
    %v113 = vunpack.c.h.b16 %v64
    %v114 = vunpack.c.l.b16 %v65
    %v115 = vunpack.c.h.b16 %v65
    %v116 = vunpack.c.l.b16 %v66
    %v117 = vunpack.c.h.b16 %v66
    %v118 = vunpack.c.l.b16 %v67
    %v119 = vunpack.c.h.b16 %v67
    %v120 = vunpack.c.l.b16 %v68
    %v121 = vunpack.c.h.b16 %v68
    %v122 = vunpack.c.l.b16 %v69
    %v123 = vunpack.c.h.b16 %v69
    %v124 = vunpack.c.l.b16 %v70
    %v125 = vunpack.c.h.b16 %v70
    %v126 = vpack.c.b16 %v112, %v110
    %v127 = vpack.c.b16 %v113, %v111
    %v128 = vpack.c.b16 %v116, %v114
    %v129 = vpack.c.b16 %v117, %v115
    %v130 = vpack.c.b16 %v120, %v118
    %v131 = vpack.c.b16 %v121, %v119
    %v132 = vpack.c.b16 %v124, %v122
    %v133 = vpack.c.b16 %v125, %v123
    %v162 = vunpack.c.l.b16 %v71
    %v163 = vunpack.c.l.b16 %v72
    %v164 = vunpack.c.l.b16 %v73
    %v165 = vunpack.c.l.b16 %v74
    %v166 = vunpack.c.l.b16 %v75
    %v167 = vunpack.c.l.b16 %v76
    %v168 = vunpack.c.l.b16 %v77
    %v169 = vunpack.c.l.b16 %v78
    %v170 = vunpack.c.l.b16 %v79
    %v171 = vunpack.c.l.b16 %v80
    %v172 = vunpack.c.l.b16 %v81
    %v173 = vunpack.c.l.b16 %v82
    %v174 = vunpack.c.l.b16 %v83
    %v175 = vunpack.c.l.b16 %v84
    %v176 = vunpack.c.l.b16 %v85
    %v177 = vunpack.c.l.b16 %v86
    %v178 = vunpack.c.l.b16 %v87
    %v179 = vunpack.c.l.b16 %v88
    %v180 = vunpack.c.l.b16 %v89
    %v181 = vunpack.c.l.b16 %v90
    %v182 = vunpack.c.l.b16 %v91
    %v183 = vunpack.c.l.b16 %v92
    %v184 = vunpack.c.l.b16 %v93
    %v185 = vunpack.c.l.b16 %v94
    %v186 = vpack.c.b16 %v163, %v162
    %v187 = vpack.c.b16 %v165, %v164
    %v188 = vpack.c.b16 %v167, %v166
    %v189 = vpack.c.b16 %v169, %v168
    %v190 = vpack.c.b16 %v171, %v170
    %v191 = vpack.c.b16 %v173, %v172
    %v192 = vpack.c.b16 %v175, %v174
    %v193 = vpack.c.b16 %v177, %v176
    %v194 = vpack.c.b16 %v179, %v178
    %v195 = vpack.c.b16 %v181, %v180
    %v196 = vpack.c.b16 %v183, %v182
    %v197 = vpack.c.b16 %v185, %v184
    %vm210 = vcmask 523264
    %v212 = vsel %vm210, %v127, 0
    %v215 = vsel %vm210, %v129, 0
    %v218 = vsel %vm210, %v131, 0
    %v221 = vsel %vm210, %v133, 0
    %223 = vmatprep.subr.bf16.mxu0 0
    %224 = vmatpush1.bf16.msra.mxu0 %v193
    %225 = vmatprep.subr.bf16.mxu0 0
    %226 = vmatpush1.bf16.msra.mxu0 %v192
    %227 = vmatprep.subr.bf16.mxu0 0
    %228 = vmatpush1.bf16.msra.mxu0 %v191
    %229 = vmatprep.subr.bf16.mxu0 0
    %230 = vmatpush1.bf16.msra.mxu0 %v190
    %231 = vmatprep.subr.bf16.mxu0 0
    %232 = vmatpush1.bf16.msra.mxu0 %v189
    %233 = vmatprep.subr.bf16.mxu0 0
    %234 = vmatpush1.bf16.msra.mxu0 %v188
    %235 = vmatprep.subr.bf16.mxu0 0
    %236 = vmatpush1.bf16.msra.mxu0 %v187
    %237 = vmatprep.subr.bf16.mxu0 0
    %238 = vmatpush1.bf16.msra.mxu0 %v186
    %239 = vmatprep.subr.bf16.mxu0 0
    %240 = vmatpush2.bf16.msra.mxu0 0
    %241 = vmatprep.subr.bf16.mxu0 0
    %242 = vmatpush2.bf16.msra.mxu0 0
    %243 = vmatprep.subr.bf16.mxu0 0
    %244 = vmatpush2.bf16.msra.mxu0 0
    %245 = vmatprep.subr.bf16.mxu0 0
    %246 = vmatpush2.bf16.msra.mxu0 0
    %247 = vmatprep.subr.bf16.mxu0 0
    %248 = vmatpush2.bf16.msra.mxu0 %v197
    %249 = vmatprep.subr.bf16.mxu0 0
    %250 = vmatpush2.bf16.msra.mxu0 %v196
    %251 = vmatprep.subr.bf16.mxu0 0
    %252 = vmatpush2.bf16.msra.mxu0 %v195
    %253 = vmatprep.subr.bf16.mxu0 0
    %254 = vmatpush2.bf16.msra.mxu0 %v194
    %255 = vmatprep.mubr.bf16.mxu0 %v212
    %256 = vmatmul.mubr.bf16.gmra.mxu0 %v126
    %v257 = vpop.f32.mrf.mxu0
    %v258 = vadd.f32 %v100, %v257
    %v259 = vpop.f32.mrf.mxu0
    %v260 = vpop.f32.mrf.mxu0
    %v261 = vadd.f32 %v100, %v260
    %v262 = vpop.f32.mrf.mxu0
    %263 = vmatprep.mubr.bf16.mxu0 %v215
    %264 = vmatmul.mubr.bf16.gmra.mxu0 %v128
    %v265 = vpop.f32.mrf.mxu0
    %v266 = vadd.f32 %v100, %v265
    %v267 = vpop.f32.mrf.mxu0
    %v268 = vpop.f32.mrf.mxu0
    %v269 = vadd.f32 %v100, %v268
    %v270 = vpop.f32.mrf.mxu0
    %271 = vmatprep.mubr.bf16.mxu0 %v218
    %272 = vmatmul.mubr.bf16.gmra.mxu0 %v130
    %v273 = vpop.f32.mrf.mxu0
    %v274 = vadd.f32 %v100, %v273
    %v275 = vpop.f32.mrf.mxu0
    %v276 = vpop.f32.mrf.mxu0
    %v277 = vadd.f32 %v100, %v276
    %v278 = vpop.f32.mrf.mxu0
    %279 = vmatprep.mubr.bf16.mxu0 %v221
    %280 = vmatmul.mubr.bf16.gmra.mxu0 %v132
    %v281 = vpop.f32.mrf.mxu0
    %v282 = vadd.f32 %v100, %v281
    %v283 = vpop.f32.mrf.mxu0
    %v284 = vpop.f32.mrf.mxu0
    %v285 = vadd.f32 %v100, %v284
    %v286 = vpop.f32.mrf.mxu0
    %287 = vdwg.mxu0
    %v288 = vmax.f32 %v258, 0.0
    %v289 = vmax.f32 %v261, 0.0
    %v290 = vmax.f32 %v266, 0.0
    %v291 = vmax.f32 %v269, 0.0
    %v292 = vmax.f32 %v274, 0.0
    %v293 = vmax.f32 %v277, 0.0
    %v294 = vmax.f32 %v282, 0.0
    %v295 = vmax.f32 %v285, 0.0
    %v296 = vpack.c.bf16 %v289, %v288
    %v297 = vpack.c.bf16 %v291, %v290
    %v298 = vpack.c.bf16 %v293, %v292
    %v299 = vpack.c.bf16 %v295, %v294
    %v300 = vld [vmem:[#allocation7] sm:$0xf]
    %v301 = vld [vmem:[#allocation7 + $0x4] sm:$0xf]
    %v302 = vld [vmem:[#allocation7 + $0x8] sm:$0xf]
    %v303 = vld [vmem:[#allocation7 + $0xc] sm:$0xf]
    %v304 = vld [vmem:[#allocation7 + $0x10] sm:$0xf]
    %v305 = vld [vmem:[#allocation7 + $0x14] sm:$0xf]
    %v306 = vld [vmem:[#allocation7 + $0x18] sm:$0xf]
    %v307 = vld [vmem:[#allocation7 + $0x1c] sm:$0xf]
    %v308 = vld [vmem:[#allocation7 + $0x20] sm:$0xf]
    %v309 = vld [vmem:[#allocation7 + $0x24] sm:$0xf]
    %v310 = vld [vmem:[#allocation7 + $0x28] sm:$0xf]
    %v311 = vld [vmem:[#allocation7 + $0x2c] sm:$0xf]
    %v312 = vld [vmem:[#allocation7 + $0x30] sm:$0xf]
    %v313 = vld [vmem:[#allocation7 + $0x34] sm:$0xf]
    %v314 = vld [vmem:[#allocation7 + $0x38] sm:$0xf]
    %v315 = vld [vmem:[#allocation7 + $0x3c] sm:$0xf]
    %v316 = vld [vmem:[%s4] sm:$0x1]
    %v318 = vlaneseq
    %v319 = vshrl.u32 %v318, 7
    %v320 = vsub.s32 0, %v319
    %v321 = vrot.slane %v316, %v320
    %v339 = vunpack.c.l.b16 %v300
    %v340 = vunpack.c.l.b16 %v301
    %v341 = vunpack.c.l.b16 %v302
    %v342 = vunpack.c.l.b16 %v303
    %v343 = vunpack.c.l.b16 %v304
    %v344 = vunpack.c.l.b16 %v305
    %v345 = vunpack.c.l.b16 %v306
    %v346 = vunpack.c.l.b16 %v307
    %v347 = vunpack.c.l.b16 %v308
    %v348 = vunpack.c.l.b16 %v309
    %v349 = vunpack.c.l.b16 %v310
    %v350 = vunpack.c.l.b16 %v311
    %v351 = vunpack.c.l.b16 %v312
    %v352 = vunpack.c.l.b16 %v313
    %v353 = vunpack.c.l.b16 %v314
    %v354 = vunpack.c.l.b16 %v315
    %v355 = vpack.c.b16 %v340, %v339
    %v356 = vpack.c.b16 %v342, %v341
    %v357 = vpack.c.b16 %v344, %v343
    %v358 = vpack.c.b16 %v346, %v345
    %v359 = vpack.c.b16 %v348, %v347
    %v360 = vpack.c.b16 %v350, %v349
    %v361 = vpack.c.b16 %v352, %v351
    %v362 = vpack.c.b16 %v354, %v353
    %371 = vmatprep.subr.bf16.mxu0 0
    %372 = vmatpush1.bf16.msra.mxu0 %v362
    %373 = vmatprep.subr.bf16.mxu0 0
    %374 = vmatpush1.bf16.msra.mxu0 %v361
    %375 = vmatprep.subr.bf16.mxu0 0
    %376 = vmatpush1.bf16.msra.mxu0 %v360
    %377 = vmatprep.subr.bf16.mxu0 0
    %378 = vmatpush1.bf16.msra.mxu0 %v359
    %379 = vmatprep.subr.bf16.mxu0 0
    %380 = vmatpush1.bf16.msra.mxu0 %v358
    %381 = vmatprep.subr.bf16.mxu0 0
    %382 = vmatpush1.bf16.msra.mxu0 %v357
    %383 = vmatprep.subr.bf16.mxu0 0
    %384 = vmatpush1.bf16.msra.mxu0 %v356
    %385 = vmatprep.subr.bf16.mxu0 0
    %386 = vmatpush1.bf16.msra.mxu0 %v355
    %387 = vmatprep.subr.bf16.mxu0 0
    %388 = vmatpush2.bf16.msra.mxu0 0
    %389 = vmatprep.subr.bf16.mxu0 0
    %390 = vmatpush2.bf16.msra.mxu0 0
    %391 = vmatprep.subr.bf16.mxu0 0
    %392 = vmatpush2.bf16.msra.mxu0 0
    %393 = vmatprep.subr.bf16.mxu0 0
    %394 = vmatpush2.bf16.msra.mxu0 0
    %395 = vmatprep.subr.bf16.mxu0 0
    %396 = vmatpush2.bf16.msra.mxu0 0
    %397 = vmatprep.subr.bf16.mxu0 0
    %398 = vmatpush2.bf16.msra.mxu0 0
    %399 = vmatprep.subr.bf16.mxu0 0
    %400 = vmatpush2.bf16.msra.mxu0 0
    %401 = vmatprep.subr.bf16.mxu0 0
    %402 = vmatpush2.bf16.msra.mxu0 0
    %403 = vmatprep.mubr.bf16.mxu0 0
    %404 = vmatmul.mubr.bf16.gmra.mxu0 %v296
    %v405 = vpop.f32.mrf.mxu0
    %v406 = vadd.f32 %v321, %v405
    %v407 = vpop.f32.mrf.mxu0
    %v408 = vpop.f32.mrf.mxu0
    %v409 = vadd.f32 %v321, %v408
    %v410 = vpop.f32.mrf.mxu0
    %411 = vmatprep.mubr.bf16.mxu0 0
    %412 = vmatmul.mubr.bf16.gmra.mxu0 %v297
    %v413 = vpop.f32.mrf.mxu0
    %v414 = vadd.f32 %v321, %v413
    %v415 = vpop.f32.mrf.mxu0
    %v416 = vpop.f32.mrf.mxu0
    %v417 = vadd.f32 %v321, %v416
    %v418 = vpop.f32.mrf.mxu0
    %419 = vmatprep.mubr.bf16.mxu0 0
    %420 = vmatmul.mubr.bf16.gmra.mxu0 %v298
    %v421 = vpop.f32.mrf.mxu0
    %v422 = vadd.f32 %v321, %v421
    %v423 = vpop.f32.mrf.mxu0
    %v424 = vpop.f32.mrf.mxu0
    %v425 = vadd.f32 %v321, %v424
    %v426 = vpop.f32.mrf.mxu0
    %427 = vmatprep.mubr.bf16.mxu0 0
    %428 = vmatmul.mubr.bf16.gmra.mxu0 %v299
    %v429 = vpop.f32.mrf.mxu0
    %v430 = vadd.f32 %v321, %v429
    %v431 = vpop.f32.mrf.mxu0
    %v432 = vpop.f32.mrf.mxu0
    %v433 = vadd.f32 %v321, %v432
    %v434 = vpop.f32.mrf.mxu0
    %435 = vdwg.mxu0
    %v436 = vpack.c.bf16 %v409, %v406
    %v437 = vpack.c.bf16 %v417, %v414
    %v438 = vpack.c.bf16 %v425, %v422
    %v439 = vpack.c.bf16 %v433, %v430
    %v444 = vunpack.c.l.b16 %v436
    %v445 = vunpack.c.h.b16 %v436
    %v446 = vunpack.c.l.b16 %v437
    %v447 = vunpack.c.h.b16 %v437
    %v448 = vunpack.c.l.b16 %v438
    %v449 = vunpack.c.h.b16 %v438
    %v450 = vunpack.c.l.b16 %v439
    %v451 = vunpack.c.h.b16 %v439
    %v452 = vpack.c.b16 %v444, %v444
    %v453 = vpack.c.b16 %v445, %v445
    %v454 = vpack.c.b16 %v446, %v446
    %v455 = vpack.c.b16 %v447, %v447
    %v456 = vpack.c.b16 %v448, %v448
    %v457 = vpack.c.b16 %v449, %v449
    %v458 = vpack.c.b16 %v450, %v450
    %v459 = vpack.c.b16 %v451, %v451
    %468 = vst [vmem:[#allocation8] sm:$0xf] %v452
    %469 = vst [vmem:[#allocation8 + $0x4] sm:$0xf] %v453
    %470 = vst [vmem:[#allocation8 + $0x8] sm:$0xf] %v454
    %471 = vst [vmem:[#allocation8 + $0xc] sm:$0xf] %v455
    %472 = vst [vmem:[#allocation8 + $0x10] sm:$0xf] %v456
    %473 = vst [vmem:[#allocation8 + $0x14] sm:$0xf] %v457
    %474 = vst [vmem:[#allocation8 + $0x18] sm:$0xf] %v458
    %475 = vst [vmem:[#allocation8 + $0x1c] sm:$0xf] %v459
    // Predicated region
    $region34: #{tpu_custom_call.1} parent=1 // pred_check
      _
    $region35: #{tpu_custom_call.1} parent=1 // pred_check_branch
      %477 = sbr.rel (0) target = $region37
    $region36: #{tpu_custom_call.1} parent=1 // pred_region
      %s479 = ssub.s32 512, 512
      %480 = vsyncadd [#allocation4], %s479
      %s481 = sshll.u32 [#allocation8], 4
      %s482 = int_to_ptr.vmem [resolvable:$true] %s481
      %487 = dma.vmem_to_hbm [thread:$0]  %s482, 512, %s5, [#allocation4], 64, 64, 4
    $region37: #{tpu_custom_call.1} parent=1 // pred_fallthru
      _
    // Predicated region
    $region38: #{tpu_custom_call.1} parent=1 // pred_check
      _
    $region39: #{tpu_custom_call.1} parent=1 // pred_check_branch
      %489 = sbr.rel (0) target = $region41
    $region40: #{tpu_custom_call.1} parent=1 // pred_region
      %490 = dma.done [#allocation4], 512
    $region41: #{tpu_custom_call.1} parent=1 // pred_fallthru
      _
    %491 = vsyncpa [#allocation3], 1
    %492 = vsyncpa [#allocation6], 1
    %493 = vsyncpa [#allocation4], 1

</llo_original>
